<compile_context>
chip_gen: v5e
topology: v5e:2x2
jax: 0.10.0
libtpu: 0.0.40
codegen_flags: <defaults>
</compile_context>

<pallas_src>
import jax
import jax.numpy as jnp
import numpy as np
from jax.experimental import pallas as pl
from jax.experimental.pallas import tpu as pltpu

_LANES = 128
_MIN_TILE_BYTES = 256 << 10      # stop shrinking tiles below this chasing steps
_MIN_GRID_STEPS = 8              # DMA overlap + dual-TC (v7x) sharding
_SMALL_BYPASS_BYTES = 256 << 10  # below this, a plain XLA multiply wins


def _cdiv(a, b):
    return -(-a // b)


def _sublane_granularity(dtype):
    # Packed-row granularity per vreg: 8 rows (f32), 16 (bf16), 32 (int8/fp8).
    return max(8, 32 // jnp.dtype(dtype).itemsize)


def _vmem_capacity_bytes():
    try:
        cap = int(pltpu.get_tpu_info().vmem_capacity_bytes)
        if cap > 0:
            return cap
    except Exception:  # interpret mode / older runtime: fall back conservatively
        pass
    return 64 << 20  # v7x-sized floor; bigger-VMEM chips just get headroom


def _tile_target_bytes(cap):
    # 2x input + 2x output double buffers should sit at ~55% of physical VMEM.
    return int(max(2 << 20, min(8 << 20, (cap * 55 // 100) // 4)))


def _vmem_limit_bytes(cap, tile_bytes, mask_tile_bytes):
    # 2x double-buffered input tiles + 2x output tiles + mask buffers + slack.
    want = 4 * tile_bytes + 2 * mask_tile_bytes + (8 << 20)
    want = max(want, 32 << 20)               # never below the usual scoped default
    return int(min(want, cap - (4 << 20)))   # never above physical VMEM - headroom


def _pick_tiles(B, R, C, dtype, target_bytes):
    """Choose (batch_rows, rows) per block; guarantee a multi-step grid."""
    itemsize = jnp.dtype(dtype).itemsize
    gran = _sublane_granularity(dtype)
    row_bytes = max(1, C * itemsize)

    def round_gran(r):
        return max(gran, (r // gran) * gran)

    rows_cap = round_gran(target_bytes // row_bytes)
    if rows_cap >= R:
        rb = R
        bb = max(1, min(B, target_bytes // max(1, R * row_bytes)))
    else:
        rb = min(R, rows_cap)
        bb = 1

    def steps(bb_, rb_):
        return _cdiv(B, bb_) * _cdiv(R, rb_)

    # Enforce >= _MIN_GRID_STEPS so the pipeline actually overlaps DMA and a
    # v7x megacore has >= 2 parallel blocks to shard (split B first, then R).
    while steps(bb, rb) < _MIN_GRID_STEPS and bb > 1:
        bb = max(1, bb // 2)
    min_rows = round_gran(max(gran, _MIN_TILE_BYTES // max(1, bb * row_bytes)))
    while steps(bb, rb) < _MIN_GRID_STEPS and rb > min_rows:
        new_rb = max(min_rows, round_gran(_cdiv(rb, 2)))
        if new_rb >= rb:
            break
        rb = new_rb
    return int(bb), int(rb)


# --------------------------- standalone SpatialDropout ------------------------


def _mask_scale_kernel(m_ref, x_ref, o_ref):
    # m_ref: (bb, 1, C) f32 pre-scaled keep mask; x/o: (bb, rb, C).
    # f32 multiply (mixed-precision safe), single cast at the store.
    o_ref[...] = (x_ref[...] * m_ref[...]).astype(o_ref.dtype)


def _masked_scale(x, mask, *, b_blk, r_blk, vmem_limit):
    B, R, C = x.shape
    grid = (_cdiv(B, b_blk), _cdiv(R, r_blk))
    return pl.pallas_call(
        _mask_scale_kernel,
        out_shape=jax.ShapeDtypeStruct((B, R, C), x.dtype),
        grid=grid,
        in_specs=[
            pl.BlockSpec((b_blk, 1, C), lambda i, j: (i, 0, 0)),       # mask (f32)
            pl.BlockSpec((b_blk, r_blk, C), lambda i, j: (i, j, 0)),   # x
        ],
        out_specs=pl.BlockSpec((b_blk, r_blk, C), lambda i, j: (i, j, 0)),
        compiler_params=pltpu.CompilerParams(
            dimension_semantics=("parallel", "parallel"),
            vmem_limit_bytes=int(vmem_limit),
        ),
    )(mask, x)


def _dropout_mask(key, B, C, p, training=True):
    """Per-(batch, channel) keep mask with the 1/(1-p) rescale pre-folded (f32)."""
    if (not training) or p <= 0.0:
        return jnp.ones((B, 1, C), jnp.float32)
    if p >= 1.0:
        return jnp.zeros((B, 1, C), jnp.float32)   # no 0*inf NaN
    keep = jax.random.bernoulli(key, 1.0 - p, (B, 1, C))
    return keep.astype(jnp.float32) * jnp.float32(1.0 / (1.0 - p))


def _lane_dense(x, mask):
    """Return (x2, mask2, restore) with x2 having a lane-dense (%128) last dim."""
    B, T, C = x.shape
    if C % _LANES == 0:
        # Real backbone widths (resnet18/34: 512, densenet121: 1024, resnet50:
        # 2048) all take this zero-copy path.
        return x, mask, (lambda y: y)
    if _LANES % C == 0:
        # Fold timesteps into the 128-lane axis (channel = lane % C); pad T
        # minimally so (T*C) % 128 == 0.
        rows_per_sub = _LANES // C
        Tp = _cdiv(T, rows_per_sub) * rows_per_sub
        xp = x if Tp == T else jnp.pad(x, ((0, 0), (0, Tp - T), (0, 0)))
        R = (Tp * C) // _LANES
        x2 = xp.reshape(B, R, _LANES)
        mask2 = jnp.tile(mask, (1, 1, rows_per_sub))

        def restore(y):
            y = y.reshape(B, Tp, C)
            return y if Tp == T else y[:, :T, :]

        return x2, mask2, restore
    # Irregular C: pad channels up to a multiple of 128 so stores stay
    # full-width vst instead of masked vst.msk.
    Cp = _cdiv(C, _LANES) * _LANES
    x2 = jnp.pad(x, ((0, 0), (0, 0), (0, Cp - C)))
    mask2 = jnp.pad(mask, ((0, 0), (0, 0), (0, Cp - C)))
    return x2, mask2, (lambda y: y[:, :, :C])


def spatial_dropout(x, key, p=0.2, training=True, *,
                    min_pallas_bytes=_SMALL_BYPASS_BYTES):
    """SpatialDropout on x: (B, T, C). Drops whole channels per batch element."""
    if (not training) or p <= 0.0:
        return x
    B, T, C = x.shape
    if p >= 1.0:
        return jnp.zeros_like(x)   # PyTorch Dropout2d(p=1) -> all zeros

    mask = _dropout_mask(key, B, C, p, training)          # (B, 1, C) f32

    itemsize = jnp.dtype(x.dtype).itemsize
    if x.size * itemsize < min_pallas_bytes:
        # Tiny tensor: kernel launch + grid setup dominates; let XLA fuse it.
        return (x.astype(jnp.float32) * mask).astype(x.dtype)

    x2, mask2, restore = _lane_dense(x, mask)
    Bx, R, Cx = x2.shape
    cap = _vmem_capacity_bytes()
    bb, rb = _pick_tiles(Bx, R, Cx, x2.dtype, _tile_target_bytes(cap))
    tile_bytes = bb * rb * Cx * itemsize
    vmem_limit = _vmem_limit_bytes(cap, tile_bytes, bb * Cx * 4)
    y2 = _masked_scale(x2, mask2, b_blk=bb, r_blk=rb, vmem_limit=vmem_limit)
    return restore(y2)


# ------------------ fused SpatialDropout + LSTM1 input projection -------------


def _fused_dropout_linear_kernel(m_ref, x_ref, w_ref, b_ref, o_ref, acc_ref):
    k = pl.program_id(3)

    @pl.when(k == 0)
    def _init():
        acc_ref[...] = jnp.zeros_like(acc_ref)

    # Dropout mask multiply rides in the VPU slot of the MXU-bound matmul.
    xm = (x_ref[0] * m_ref[0]).astype(w_ref.dtype)          # (tq, tk)
    acc_ref[...] += jnp.dot(xm, w_ref[...], preferred_element_type=jnp.float32)

    @pl.when(k == pl.num_programs(3) - 1)
    def _finalize():
        o_ref[0] = (acc_ref[...] + b_ref[...]).astype(o_ref.dtype)


def _pick_div(n, candidates):
    for c in candidates:
        if n % c == 0:
            return c
    return n


def spatial_dropout_lstm_input_proj(x, key, w, b, p=0.2, training=True):
    """Fused SpatialDropout + LSTM1 input projection: dropout(x) @ w + b.

    w: (C, 8*LSTM_UNITS) = both directions' W_ih stacked & transposed,
    b: (8*LSTM_UNITS,).  Removes the standalone dropout's extra HBM round
    trip over the activation tensor.
    """
    B, T, C = x.shape
    Cw, N = w.shape
    assert Cw == C, "weight in-features must match embedding width"

    mask = _dropout_mask(key, B, C, p, training)              # (B, 1, C) f32
    b2 = jnp.asarray(b, jnp.float32).reshape(1, N)

    tq = min(T, 128)
    tn = _pick_div(N, (256, 128, 512))
    tk = _pick_div(C, (256, 512, 128))   # K tiles must divide C exactly
    grid = (B, _cdiv(T, tq), _cdiv(N, tn), C // tk)

    return pl.pallas_call(
        _fused_dropout_linear_kernel,
        out_shape=jax.ShapeDtypeStruct((B, T, N), x.dtype),
        grid=grid,
        in_specs=[
            pl.BlockSpec((1, 1, tk), lambda bi, ti, ni, ki: (bi, 0, ki)),    # mask
            pl.BlockSpec((1, tq, tk), lambda bi, ti, ni, ki: (bi, ti, ki)),  # x
            pl.BlockSpec((tk, tn), lambda bi, ti, ni, ki: (ki, ni)),         # w
            pl.BlockSpec((1, tn), lambda bi, ti, ni, ki: (0, ni)),           # bias
        ],
        out_specs=pl.BlockSpec((1, tq, tn), lambda bi, ti, ni, ki: (bi, ti, ni)),
        scratch_shapes=[pltpu.VMEM((tq, tn), jnp.float32)],
        compiler_params=pltpu.CompilerParams(
            dimension_semantics=("parallel", "parallel", "parallel", "arbitrary"),
        ),
    )(mask, x, w, b2)


# ------------------------------------ tests -----------------------------------

if __name__ == "__main__":
    root = jax.random.PRNGKey(0)
    kx, kd, kw, kb, kx2, kx3 = jax.random.split(root, 6)

    p = 0.2
    scale = 1.0 / (1.0 - p)

    # 1) SpatialDropout at the real backbone width (resnet18 embed = 512).
    B, T, C = 2, 8, 512
    x = jax.random.normal(kx, (B, T, C), dtype=jnp.float32)
    y = jax.block_until_ready(
        spatial_dropout(x, kd, p=p, training=True, min_pallas_bytes=0))
    assert y.shape == (B, T, C) and y.dtype == x.dtype
    xn, yn = np.asarray(x), np.asarray(y)
    dropped = np.max(np.abs(yn), axis=1) == 0.0                        # (B, C)
    kept_ok = np.all(np.isclose(yn, xn * scale, rtol=1e-5, atol=1e-5), axis=1)
    assert np.all(dropped | kept_ok), "Dropout2d column semantics violated"
    assert 0 < dropped.sum() < dropped.size
    mask_ref = np.asarray(_dropout_mask(kd, B, C, p, True))
    assert np.allclose(yn, xn * mask_ref, rtol=1e-6, atol=1e-6)

    # 2) Small C: lane-dense repack with minimal T padding (T*C % 128 != 0).
    B2, T2, C2 = 2, 7, 32
    x2 = jax.random.normal(kx2, (B2, T2, C2), dtype=jnp.float32)
    y2 = jax.block_until_ready(
        spatial_dropout(x2, kd, p=p, training=True, min_pallas_bytes=0))
    m2 = np.asarray(_dropout_mask(kd, B2, C2, p, True))
    assert np.allclose(np.asarray(y2), np.asarray(x2) * m2, rtol=1e-6, atol=1e-6)

    # 3) Irregular C (neither divides nor is divided by 128): channel padding.
    B3, T3, C3 = 2, 8, 192
    x3 = jax.random.normal(kx3, (B3, T3, C3), dtype=jnp.float32)
    y3 = jax.block_until_ready(
        spatial_dropout(x3, kd, p=p, training=True, min_pallas_bytes=0))
    m3 = np.asarray(_dropout_mask(kd, B3, C3, p, True))
    assert np.allclose(np.asarray(y3), np.asarray(x3) * m3, rtol=1e-6, atol=1e-6)

    # 4) bf16 activations: mask/scale stays f32, single cast at the store.
    xb = x.astype(jnp.bfloat16)
    yb = jax.block_until_ready(
        spatial_dropout(xb, kd, p=p, training=True, min_pallas_bytes=0))
    refb = (xb.astype(jnp.float32) * _dropout_mask(kd, B, C, p, True)
            ).astype(jnp.bfloat16)
    assert yb.dtype == jnp.bfloat16
    assert bool(jnp.allclose(yb.astype(jnp.float32), refb.astype(jnp.float32),
                             rtol=2e-2, atol=2e-2))

    # 5) Edge cases: eval / p=0 identity, p=1 exact zeros (no NaN), tiny bypass.
    assert np.allclose(np.asarray(spatial_dropout(x, kd, p=p, training=False)), xn)
    assert np.allclose(np.asarray(spatial_dropout(x, kd, p=0.0, training=True)), xn)
    y_all = spatial_dropout(x, kd, p=1.0, training=True)
    assert float(jnp.max(jnp.abs(y_all))) == 0.0
    assert not bool(jnp.any(jnp.isnan(y_all)))
    ys = jax.block_until_ready(
        spatial_dropout(jax.random.normal(kx, (2, 8, 32), jnp.float32), kd, p=p))
    assert ys.shape == (2, 8, 32)

    # 6) Fused SpatialDropout -> LSTM1 input projection (bidirectional, 4 gates).
    LSTM_UNITS = 64
    N = 2 * 4 * LSTM_UNITS
    w = jax.random.normal(kw, (C, N), dtype=jnp.float32) * 0.05
    bias = jax.random.normal(kb, (N,), dtype=jnp.float32) * 0.05
    out = jax.block_until_ready(
        spatial_dropout_lstm_input_proj(x, kd, w, bias, p=p, training=True))
    assert out.shape == (B, T, N) and out.dtype == x.dtype
    ref = (xn * mask_ref).astype(np.float64) @ np.asarray(w).astype(np.float64) \
          + np.asarray(bias).astype(np.float64)
    assert np.allclose(np.asarray(out), ref, rtol=5e-2, atol=5e-2), \
        "fused dropout + input-projection mismatch"

    print("KERNEL_OK")
</pallas_src>

<mosaic_0001>
module attributes {stable_mosaic.version = 11 : i64} {
  func.func @_mask_scale_kernel(%arg0: i32, %arg1: i32, %arg2: memref<1x1x512xf32, #tpu.memory_space<vmem>>, %arg3: memref<1x8x512xf32, #tpu.memory_space<vmem>>, %arg4: memref<1x8x512xf32, #tpu.memory_space<vmem>>) attributes {dimension_semantics = [#tpu.dimension_semantics<parallel>, #tpu.dimension_semantics<parallel>], iteration_bounds = array<i64: 2, 1>, scalar_prefetch = 0 : i64, scratch_operands = 0 : i64, tpu.core_type = #tpu.core_type<tc>, window_params = [{transform_indices = @transform_0, window_bounds = array<i64: 1, 1, 512>}, {transform_indices = @transform_1, window_bounds = array<i64: 1, 8, 512>}, {transform_indices = @transform_2, window_bounds = array<i64: 1, 8, 512>}]} {
    %c0 = arith.constant 0 : index
    %c0_0 = arith.constant 0 : index
    %c0_1 = arith.constant 0 : index
    %0 = vector.load %arg3[%c0, %c0_0, %c0_1] : memref<1x8x512xf32, #tpu.memory_space<vmem>>, vector<1x8x512xf32>
    %c0_2 = arith.constant 0 : index
    %c0_3 = arith.constant 0 : index
    %c0_4 = arith.constant 0 : index
    %1 = vector.load %arg2[%c0_2, %c0_3, %c0_4] : memref<1x1x512xf32, #tpu.memory_space<vmem>>, vector<1x1x512xf32>
    %2 = vector.broadcast %1 : vector<1x1x512xf32> to vector<1x8x512xf32>
    %3 = arith.mulf %0, %2 : vector<1x8x512xf32>
    %c0_5 = arith.constant 0 : index
    %c0_6 = arith.constant 0 : index
    %c0_7 = arith.constant 0 : index
    %4 = vector.load %arg4[%c0_5, %c0_6, %c0_7] : memref<1x8x512xf32, #tpu.memory_space<vmem>>, vector<1x8x512xf32>
    tpu.vector_store %arg4[%c0_5, %c0_6, %c0_7], %3 {strides = array<i32>} : memref<1x8x512xf32, #tpu.memory_space<vmem>>, vector<1x8x512xf32>,
    return
  }
  func.func @transform_0(%arg0: i32, %arg1: i32) -> (i32, i32, i32) {
    %c0_i32 = arith.constant 0 : i32
    %c0_i32_0 = arith.constant 0 : i32
    %c0_i32_1 = arith.constant 0 : i32
    return %arg0, %c0_i32, %c0_i32_0 : i32, i32, i32
  }
  func.func @transform_1(%arg0: i32, %arg1: i32) -> (i32, i32, i32) {
    %c0_i32 = arith.constant 0 : i32
    %c0_i32_0 = arith.constant 0 : i32
    return %arg0, %arg1, %c0_i32 : i32, i32, i32
  }
  func.func @transform_2(%arg0: i32, %arg1: i32) -> (i32, i32, i32) {
    %c0_i32 = arith.constant 0 : i32
    %c0_i32_0 = arith.constant 0 : i32
    return %arg0, %arg1, %c0_i32 : i32, i32, i32
  }
}

</mosaic_0001>

<llo_original>
// kernel: tpu_custom_call.1
$region0: #{tpu_custom_call.1}
  #allocation0 [shape = 'u32[]', space=smem, size = 0x4, offset = 0x4, fixed_abs, tag = 'smem constant byte address 0x4 - core index']
  #allocation1 [shape = 'u32[72,128]{1,0:T(1,128)}', space=vmem, size = 0x9000, scoped, tag = 'internal scratch']
  %s0 = inlined_call_operand.hbm [shape: f32[2,1,512], index: 0, kind: input, shape index: {}]
  %s1 = inlined_call_operand.hbm [shape: f32[2,8,512], index: 1, kind: input, shape index: {}]
  %s2 = inlined_call_operand.hbm [shape: f32[2,8,512], index: 2, kind: output, shape index: {}]
  %s3 = sld [smem:[#allocation0]]
  $region49: #{tpu_custom_call.1} parent=0
    _
  %s5 = ssub.s32 1, %s3
  %s6 = scalar_select 0, %s5, %s3
  $region1: #{tpu_custom_call.1} parent=0
    #allocation2 [shape = 'u8[4096]{0}', space=vmem, size = 0x1000, scoped, tag = 'input window, operand 0']
    #allocation3 [shape = 's32[2]{0}', space=sflag, size = 0x8, scoped, tag = 'scoped memory for tpu_custom_call.1']
    #allocation4 [shape = 's32[2]{0}', space=sflag, size = 0x8, scoped, tag = 'scoped memory for tpu_custom_call.1']
    #allocation5 [shape = 'u8[32768]{0}', space=vmem, size = 0x8000, scoped, tag = 'input window, operand 1']
    #allocation6 [shape = 's32[2]{0}', space=sflag, size = 0x8, scoped, tag = 'scoped memory for tpu_custom_call.1']
    #allocation7 [shape = 'u8[32768]{0}', space=vmem, size = 0x8000, scoped, tag = 'output window, operand 0']
    %7 = vsyncpa [#allocation3], 0
    %s8 = scalar_lea.sflag [#allocation3], 1
    %9 = vsyncpa %s8, 0
    %10 = vsyncpa [#allocation6], 0
    %s11 = scalar_lea.sflag [#allocation6], 1
    %12 = vsyncpa %s11, 0
    %13 = vsyncpa [#allocation4], 0
    %s14 = scalar_lea.sflag [#allocation4], 1
    %15 = vsyncpa %s14, 0
    loop: start=0, step=1, limit=4
    $region2: #{tpu_custom_call.1} parent=1 // loop_pre_header
      _
    $region3: #{tpu_custom_call.1} parent=1 // loop_header
      %s17 = sphi 0, %s21
      %p18 = scmp.ge.s32.totalorder %s17, 4
      %s24 = sphi 0, %s36
      %s25 = sphi 0, %s32
      %s26 = sphi 0, %s24
      %s27 = sphi 0, %s25
      %s28 = sphi 0, %s26
      %s29 = sphi 0, %s27
      %s39 = sphi 0, %s41
      %s42 = sphi 0, %s39
      %s43 = sphi 0, %s42
      %s59 = sphi 0, %s43
      %s67 = sphi 0, %s69
      %s70 = sphi 0, %s67
      %s71 = sphi 0, %s70
      %s87 = sphi 0, %s71
      %s95 = sphi 0, %s97
      %s98 = sphi 0, %s95
      %s99 = sphi 0, %s98
      %s115 = sphi 0, %s99
    $region4: #{tpu_custom_call.1} parent=1 // loop_header_branch
      %20 = sbr.rel (%p18) target = $region8
    $region5: #{tpu_custom_call.1} parent=1 // loop_body
      %s22 = ssub.s32 %s17, 1
      %s23 = ssub.s32 %s17, 2
      %s30 = sadd.s32 1, %s25
      %p31 = scmp.ge.s32.totalorder %s30, 1
      %s32 = scalar_select %p31, 0, %s30
      %s33 = sadd.s32 1, %s24
      %s34 = scalar_select %p31, %s33, %s24
      %p35 = scmp.ge.s32.totalorder %s34, 2
      %s36 = scalar_select %p35, 0, %s34
      %s37 = ssub.s32 %s24, %s36
      %p38 = scmp.eq.s32.totalorder %s37, 0
      %s40 = sadd.s32 %s39, 1
      %s41 = scalar_select %p38, %s39, %s40
      %p44 = pneg %p38
      %p45 = scmp.eq.s32.totalorder %s17, 1
      %p46 = por %p44, %p45
      %p47 = scmp.ne.s32.totalorder %s39, %s42
      %p48 = scmp.eq.s32.totalorder %s17, 0
      %p49 = por %p47, %p48
      %p50 = scmp.ne.s32.totalorder %s39, %s42
      %p51 = scmp.eq.s32.totalorder %s22, 1
      %p52 = por %p50, %p51
      %p53 = scmp.ne.s32.totalorder %s42, %s43
      %p54 = scmp.eq.s32.totalorder %s22, 0
      %p55 = por %p53, %p54
      %p56 = scmp.ne.s32.totalorder %s42, %s43
      %p57 = scmp.eq.s32.totalorder %s23, 1
      %p58 = por %p56, %p57
      %p60 = scmp.ne.s32.totalorder %s43, %s59
      %p61 = scmp.eq.s32.totalorder %s23, 0
      %p62 = por %p60, %p61
      %s63 = ssub.s32 %s24, %s36
      %s64 = ssub.s32 %s25, %s32
      %s65 = sor.u32 %s63, %s64
      %p66 = scmp.eq.s32.totalorder %s65, 0
      %s68 = sadd.s32 %s67, 1
      %s69 = scalar_select %p66, %s67, %s68
      %p72 = pneg %p66
      %p73 = scmp.eq.s32.totalorder %s17, 1
      %p74 = por %p72, %p73
      %p75 = scmp.ne.s32.totalorder %s67, %s70
      %p76 = scmp.eq.s32.totalorder %s17, 0
      %p77 = por %p75, %p76
      %p78 = scmp.ne.s32.totalorder %s67, %s70
      %p79 = scmp.eq.s32.totalorder %s22, 1
      %p80 = por %p78, %p79
      %p81 = scmp.ne.s32.totalorder %s70, %s71
      %p82 = scmp.eq.s32.totalorder %s22, 0
      %p83 = por %p81, %p82
      %p84 = scmp.ne.s32.totalorder %s70, %s71
      %p85 = scmp.eq.s32.totalorder %s23, 1
      %p86 = por %p84, %p85
      %p88 = scmp.ne.s32.totalorder %s71, %s87
      %p89 = scmp.eq.s32.totalorder %s23, 0
      %p90 = por %p88, %p89
      %s91 = ssub.s32 %s24, %s36
      %s92 = ssub.s32 %s25, %s32
      %s93 = sor.u32 %s91, %s92
      %p94 = scmp.eq.s32.totalorder %s93, 0
      %s96 = sadd.s32 %s95, 1
      %s97 = scalar_select %p94, %s95, %s96
      %p100 = pneg %p94
      %p101 = scmp.eq.s32.totalorder %s17, 1
      %p102 = por %p100, %p101
      %p103 = scmp.ne.s32.totalorder %s95, %s98
      %p104 = scmp.eq.s32.totalorder %s17, 0
      %p105 = por %p103, %p104
      %p106 = scmp.ne.s32.totalorder %s95, %s98
      %p107 = scmp.eq.s32.totalorder %s22, 1
      %p108 = por %p106, %p107
      %p109 = scmp.ne.s32.totalorder %s98, %s99
      %p110 = scmp.eq.s32.totalorder %s22, 0
      %p111 = por %p109, %p110
      %p112 = scmp.ne.s32.totalorder %s98, %s99
      %p113 = scmp.eq.s32.totalorder %s23, 1
      %p114 = por %p112, %p113
      %p116 = scmp.ne.s32.totalorder %s99, %s115
      %p117 = scmp.eq.s32.totalorder %s23, 0
      %p118 = por %p116, %p117
      %p119 = scmp.le.s32.totalorder 1, %s17
      %p120 = scmp.lt.s32.totalorder %s17, 3
      %p121 = pnand %p119, %p120
      %p122 = pneg %p121
      // Predicated region
      $region9: #{tpu_custom_call.1} parent=5 // pred_check
        _
      $region10: #{tpu_custom_call.1} parent=5 // pred_check_branch
        %124 = sbr.rel (%p121) target = $region12
      $region11: #{tpu_custom_call.1} parent=5 // pred_region
        %s125 = ssub.s32 %s17, 1
      $region12: #{tpu_custom_call.1} parent=5 // pred_fallthru
        _
      %p126 = scmp.lt.s32.totalorder %s17, 2
      // Predicated region
      $region13: #{tpu_custom_call.1} parent=5 // pred_check
        %p127 = pneg %p126
      $region14: #{tpu_custom_call.1} parent=5 // pred_check_branch
        %129 = sbr.rel (%p127) target = $region16
      $region15: #{tpu_custom_call.1} parent=5 // pred_region
        // Predicated region
        $region17: #{tpu_custom_call.1} parent=15 // pred_check
          %p130 = pneg %p49
        $region18: #{tpu_custom_call.1} parent=15 // pred_check_branch
          %132 = sbr.rel (%p130) target = $region20
        $region19: #{tpu_custom_call.1} parent=15 // pred_region
          %s133 = sand.u32 %s39, 1
          %s134 = scalar_lea.sflag [#allocation3], %s133
          %s135 = sand.u32 %s39, 1
          %s136 = smul.addr %s135, 4
          %s137 = scalar_lea.vmem [#allocation2], %s136
          %139 = vsyncadd %s134, 0
          %s140 = smul.addr %s24, 4
          %s141 = scalar_lea.hbm %s0, %s140
          %s143 = sshll.u32 %s141, 4
          %s144 = int_to_ptr.hbm [resolvable:$true] %s143
          %s145 = sshll.u32 %s137, 4
          %s146 = int_to_ptr.vmem [resolvable:$true] %s145
          %148 = dma.hbm_to_vmem [thread:$0]  %s144, 64, %s146, %s134
        $region20: #{tpu_custom_call.1} parent=15 // pred_fallthru
          _
        // Predicated region
        $region21: #{tpu_custom_call.1} parent=15 // pred_check
          %p149 = pneg %p77
        $region22: #{tpu_custom_call.1} parent=15 // pred_check_branch
          %151 = sbr.rel (%p149) target = $region24
        $region23: #{tpu_custom_call.1} parent=15 // pred_region
          %s152 = sand.u32 %s67, 1
          %s153 = scalar_lea.sflag [#allocation6], %s152
          %s154 = sand.u32 %s67, 1
          %s155 = smul.addr %s154, 32
          %s156 = scalar_lea.vmem [#allocation5], %s155
          %158 = vsyncadd %s153, 0
          %s159 = smul.addr %s25, 4
          %s160 = smul.addr %s24, 4
          %s161 = sadd.s32 %s159, %s160
          %s162 = smul.addr %s161, 8
          %s163 = scalar_lea.hbm %s1, %s162
          %s165 = sshll.u32 %s163, 4
          %s166 = int_to_ptr.hbm [resolvable:$true] %s165
          %s167 = sshll.u32 %s156, 4
          %s168 = int_to_ptr.vmem [resolvable:$true] %s167
          %170 = dma.hbm_to_vmem [thread:$0]  %s166, 512, %s168, %s153
        $region24: #{tpu_custom_call.1} parent=15 // pred_fallthru
          _
      $region16: #{tpu_custom_call.1} parent=5 // pred_fallthru
        _
      %p171 = scmp.le.s32.totalorder 1, %s17
      %p172 = scmp.lt.s32.totalorder %s17, 3
      %p173 = pnand %p171, %p172
      %p174 = pneg %p173
      // Predicated region
      $region25: #{tpu_custom_call.1} parent=5 // pred_check
        _
      $region26: #{tpu_custom_call.1} parent=5 // pred_check_branch
        %176 = sbr.rel (%p173) target = $region28
      $region27: #{tpu_custom_call.1} parent=5 // pred_region
        %s177 = ssub.s32 %s17, 1
        %s178 = sand.u32 %s42, 1
        %s179 = scalar_lea.sflag [#allocation3], %s178
        %s180 = sand.u32 %s42, 1
        %s181 = smul.addr %s180, 4
        %s182 = scalar_lea.vmem [#allocation2], %s181
        // Predicated region
        $region29: #{tpu_custom_call.1} parent=27 // pred_check
          %p183 = pneg %p55
        $region30: #{tpu_custom_call.1} parent=27 // pred_check_branch
          %185 = sbr.rel (%p183) target = $region32
        $region31: #{tpu_custom_call.1} parent=27 // pred_region
          %187 = dma.done %s179, 64
        $region32: #{tpu_custom_call.1} parent=27 // pred_fallthru
          _
        %s188 = sand.u32 %s70, 1
        %s189 = scalar_lea.sflag [#allocation6], %s188
        %s190 = sand.u32 %s70, 1
        %s191 = smul.addr %s190, 32
        %s192 = scalar_lea.vmem [#allocation5], %s191
        // Predicated region
        $region33: #{tpu_custom_call.1} parent=27 // pred_check
          %p193 = pneg %p83
        $region34: #{tpu_custom_call.1} parent=27 // pred_check_branch
          %195 = sbr.rel (%p193) target = $region36
        $region35: #{tpu_custom_call.1} parent=27 // pred_region
          %197 = dma.done %s189, 512
        $region36: #{tpu_custom_call.1} parent=27 // pred_fallthru
          _
        %s198 = sand.u32 %s42, 1
        %s199 = scalar_lea.sflag [#allocation3], %s198
        %s200 = sand.u32 %s42, 1
        %s201 = smul.addr %s200, 4
        %s202 = scalar_lea.vmem [#allocation2], %s201
        %p203 = pneg %p55
        %p204 = pneg %p52
        %s205 = sand.u32 %s70, 1
        %s206 = scalar_lea.sflag [#allocation6], %s205
        %s207 = sand.u32 %s70, 1
        %s208 = smul.addr %s207, 32
        %s209 = scalar_lea.vmem [#allocation5], %s208
        %p210 = pneg %p83
        %p211 = pneg %p80
        %p212 = pneg %p111
        %p213 = pneg %p108
        %s214 = sand.u32 %s98, 1
        %s215 = scalar_lea.sflag [#allocation4], %s214
        %s216 = sand.u32 %s98, 1
        %s217 = smul.addr %s216, 32
        %s218 = scalar_lea.vmem [#allocation7], %s217
        %v219 = vld [vmem:[%s192] sm:$0xff]
        %v220 = vld [vmem:[%s192 + $0x8] sm:$0xff]
        %v221 = vld [vmem:[%s192 + $0x10] sm:$0xff]
        %v222 = vld [vmem:[%s192 + $0x18] sm:$0xff]
        %v223 = vld [vmem:[%s182] sm:$0xf]
        %v225 = vperm.slane %v223, 0
        %v226 = vperm.slane %v223, 1
        %v227 = vperm.slane %v223, 2
        %v228 = vperm.slane %v223, 3
        %v233 = vmul.f32 %v219, %v225
        %v234 = vmul.f32 %v220, %v226
        %v235 = vmul.f32 %v221, %v227
        %v236 = vmul.f32 %v222, %v228
        %237 = vst [vmem:[%s218] sm:$0xff] %v233
        %238 = vst [vmem:[%s218 + $0x8] sm:$0xff] %v234
        %239 = vst [vmem:[%s218 + $0x10] sm:$0xff] %v235
        %240 = vst [vmem:[%s218 + $0x18] sm:$0xff] %v236
        %s241 = sand.u32 %s98, 1
        %s242 = scalar_lea.sflag [#allocation4], %s241
        %s243 = sand.u32 %s98, 1
        %s244 = smul.addr %s243, 32
        %s245 = scalar_lea.vmem [#allocation7], %s244
        // Predicated region
        $region37: #{tpu_custom_call.1} parent=27 // pred_check
          %p246 = pneg %p108
        $region38: #{tpu_custom_call.1} parent=27 // pred_check_branch
          %248 = sbr.rel (%p246) target = $region40
        $region39: #{tpu_custom_call.1} parent=27 // pred_region
          %250 = vsyncadd %s242, 0
          %s251 = smul.addr %s27, 4
          %s252 = smul.addr %s26, 4
          %s253 = sadd.s32 %s251, %s252
          %s254 = smul.addr %s253, 8
          %s255 = scalar_lea.hbm %s2, %s254
          %s257 = sshll.u32 %s245, 4
          %s258 = int_to_ptr.vmem [resolvable:$true] %s257
          %s259 = sshll.u32 %s255, 4
          %s260 = int_to_ptr.hbm [resolvable:$true] %s259
          %262 = dma.vmem_to_hbm [thread:$0]  %s258, 512, %s260, %s242
        $region40: #{tpu_custom_call.1} parent=27 // pred_fallthru
          _
      $region28: #{tpu_custom_call.1} parent=5 // pred_fallthru
        _
      %p263 = scmp.le.s32.totalorder 2, %s17
      // Predicated region
      $region41: #{tpu_custom_call.1} parent=5 // pred_check
        %p264 = pneg %p263
      $region42: #{tpu_custom_call.1} parent=5 // pred_check_branch
        %266 = sbr.rel (%p264) target = $region44
      $region43: #{tpu_custom_call.1} parent=5 // pred_region
        %s267 = ssub.s32 %s17, 2
        // Predicated region
        $region45: #{tpu_custom_call.1} parent=43 // pred_check
          %p268 = pneg %p114
        $region46: #{tpu_custom_call.1} parent=43 // pred_check_branch
          %270 = sbr.rel (%p268) target = $region48
        $region47: #{tpu_custom_call.1} parent=43 // pred_region
          %s271 = sand.u32 %s99, 1
          %s272 = scalar_lea.sflag [#allocation4], %s271
          %s273 = sand.u32 %s99, 1
          %s274 = smul.addr %s273, 32
          %s275 = scalar_lea.vmem [#allocation7], %s274
          %277 = dma.done %s272, 512
        $region48: #{tpu_custom_call.1} parent=43 // pred_fallthru
          _
      $region44: #{tpu_custom_call.1} parent=5 // pred_fallthru
        _
    $region6: #{tpu_custom_call.1} parent=1 // loop_footer
      %s21 = sadd.s32 1, %s17
    $region7: #{tpu_custom_call.1} parent=1 // loop_footer_branch
      %16 = sbr.rel target = $region3
    $region8: #{tpu_custom_call.1} parent=1 // loop_exit
      _
    %278 = vsyncpa [#allocation3], 1
    %s279 = scalar_lea.sflag [#allocation3], 1
    %280 = vsyncpa %s279, 1
    %281 = vsyncpa [#allocation6], 1
    %s282 = scalar_lea.sflag [#allocation6], 1
    %283 = vsyncpa %s282, 1
    %284 = vsyncpa [#allocation4], 1
    %s285 = scalar_lea.sflag [#allocation4], 1
    %286 = vsyncpa %s285, 1

</llo_original>
